<compile_context>
chip_gen: v7x
topology: tpu7x:2x2x1
jax: 0.10.0
libtpu: 0.0.40
codegen_flags: <defaults>
</compile_context>

<pallas_src>
import numpy as np
import jax
import jax.numpy as jnp
from jax import lax
from jax.experimental import pallas as pl
from jax.experimental.pallas import tpu as pltpu

TAG_MAP = {'O': 0, 'START': 1, 'STOP': 2, 'B-Medicinal_Name': 3, 'E-Medicinal_Name': 4,
           'B-Medicinal_Other_Name': 5, 'I-Medicinal_Other_Name': 6, 'E-Medicinal_Other_Name': 7,
           'B-Medicinal_Function': 8, 'E-Medicinal_Function': 9, 'I-Medicinal_Function': 10,
           'B-Medicinal_Use_Num': 11, 'I-Medicinal_Use_Num': 12, 'E-Medicinal_Use_Num': 13,
           'B': 14, 'E': 15, 'I': 16, 'I-Medicinal_Name': 17, 'B-Medicinal_Taste': 18,
           'E-Medicinal_Taste': 19, 'I-Medicinal_Taste': 20, 'S-Medicinal_Other_Name': 21,
           'S-Medicinal_Taste': 22, 'S-Medicinal_Use_Num': 23, 'S-Medicinal_Function': 24}
START_TAG, STOP_TAG = 'START', 'STOP'
NUM_TAGS = len(TAG_MAP)  # 25

TAG_PAD = 128            # lane-padded tag dimension (lane-dense stores)
EMISSION_PAD = -1e9      # value placed in padded tag lanes (never wins max/argmax)


# ----------------------------------------------------------------------------
# Kernel 1: bidirectional LSTM (1 layer) + hidden2tag linear.
#   - input projection hoisted (one batched matmul per direction)
#   - hidden2tag hoisted (one batched matmul at the end, lane-dense padded output)
# ----------------------------------------------------------------------------
def bilstm_tag_kernel(emb_ref,                       # (T, BP, E)
                      wih_f_ref, b_f_ref,            # (E, 4*H2), (1, 4*H2)   gate order [i,f,o,g]
                      wih_b_ref, b_b_ref,            # (E, 4*H2), (1, 4*H2)
                      whh_f_ref, whh_b_ref,          # (H2, 4*H2)
                      h0_ref, c0_ref,                # (2, BP, H2)
                      wtag_f_ref, wtag_b_ref,        # (H2, TAG_PAD)  zero-padded lanes
                      btag_ref,                      # (1, TAG_PAD)   padded lanes = EMISSION_PAD
                      out_ref,                       # (T*BP, TAG_PAD)
                      xpf_scr, xpb_scr,              # (T, BP, 4*H2) VMEM
                      hf_scr, hb_scr):               # (T, BP, H2)  VMEM
    T, BP, E = emb_ref.shape
    H2 = whh_f_ref.shape[0]
    G = 4 * H2

    # -------- hoisted input->hidden projections: two MXU matmuls over all timesteps
    emb2 = emb_ref[...].reshape(T * BP, E)
    xpf = jnp.dot(emb2, wih_f_ref[...], preferred_element_type=jnp.float32) + b_f_ref[...]
    xpb = jnp.dot(emb2, wih_b_ref[...], preferred_element_type=jnp.float32) + b_b_ref[...]
    xpf_scr[...] = xpf.reshape(T, BP, G)
    xpb_scr[...] = xpb.reshape(T, BP, G)

    whh_f = whh_f_ref[...]
    whh_b = whh_b_ref[...]

    def cell(xg, h, c, whh):
        # only the true recurrence (h @ W_hh) remains on the serial path
        gates = xg + jnp.dot(h, whh, preferred_element_type=jnp.float32)
        # gate order [i, f, o, g]: one sigmoid over a contiguous 3*H2 lane range
        act = 1.0 / (1.0 + jnp.exp(-gates[:, :3 * H2]))
        i = act[:, 0:H2]
        f = act[:, H2:2 * H2]
        o = act[:, 2 * H2:3 * H2]
        g = jnp.tanh(gates[:, 3 * H2:4 * H2])
        c_new = f * c + i * g
        h_new = o * jnp.tanh(c_new)
        return h_new, c_new

    # forward direction
    def fwd_step(t, carry):
        h, c = carry
        h, c = cell(xpf_scr[t], h, c, whh_f)
        hf_scr[t] = h
        return (h, c)
    lax.fori_loop(0, T, fwd_step, (h0_ref[0], c0_ref[0]))

    # backward direction
    def bwd_step(i, carry):
        h, c = carry
        t = T - 1 - i
        h, c = cell(xpb_scr[t], h, c, whh_b)
        hb_scr[t] = h
        return (h, c)
    lax.fori_loop(0, T, bwd_step, (h0_ref[1], c0_ref[1]))

    # -------- hoisted hidden2tag: one batched matmul, single lane-dense store
    hf2 = hf_scr[...].reshape(T * BP, H2)
    hb2 = hb_scr[...].reshape(T * BP, H2)
    out_ref[...] = (jnp.dot(hf2, wtag_f_ref[...], preferred_element_type=jnp.float32)
                    + jnp.dot(hb2, wtag_b_ref[...], preferred_element_type=jnp.float32)
                    + btag_ref[...])


# ----------------------------------------------------------------------------
# Kernel 2: Viterbi decode, one sequence per grid step.
#   Single row carry; padded tag lanes carry -1e9 emissions / zero transitions so
#   they can never win any max or argmax.
# ----------------------------------------------------------------------------
def viterbi_kernel(em_ref,        # (1, T, 1, P)  emissions, lanes >= NUM_TAGS == EMISSION_PAD
                   trans_ref,     # (P, P)        transitions zero-padded outside [TAG, TAG]
                   score_ref,     # (1, 1, 1)
                   path_ref,      # (1, 1, PATH_P) int32
                   bp_scr):       # (T, 1, P) int32 VMEM
    T = em_ref.shape[1]
    P = em_ref.shape[3]
    PATH_P = path_ref.shape[2]
    NEG = jnp.float32(-1e30)

    trans = trans_ref[...]
    sub_iota = lax.broadcasted_iota(jnp.int32, (P, P), 0)
    lane_iota2 = lax.broadcasted_iota(jnp.int32, (P, P), 1)
    eye = sub_iota == lane_iota2
    lane_iota = lax.broadcasted_iota(jnp.int32, (1, P), 1)
    path_iota = lax.broadcasted_iota(jnp.int32, (1, PATH_P), 1)

    def em_row(t):   # emissions at t as (1, P)
        return em_ref[:, pl.ds(t, 1)].reshape(1, P)

    def step(t, prev_row):
        # prev_col[i] = prev_row[i]  (row->column relayout via masked lane-reduce; XLU)
        prev_col = jnp.max(jnp.where(eye, prev_row, NEG), axis=1, keepdims=True)   # (P, 1)
        s = prev_col + trans                        # s[i, j] = trellis[t-1, i] + trans[i, j]
        smax = jnp.max(s, axis=0, keepdims=True)    # (1, P)
        bp = jnp.min(jnp.where(s == smax, sub_iota, P),
                     axis=0, keepdims=True).astype(jnp.int32)   # first argmax (torch semantics)
        bp_scr[t] = bp
        return em_row(t) + smax

    last_row = lax.fori_loop(1, T, step, em_row(0))

    m = jnp.max(last_row)
    score_ref[...] = jnp.full((1, 1, 1), m, jnp.float32)
    idx0 = jnp.min(jnp.where(last_row == m, lane_iota, P)).astype(jnp.int32)

    # build the decoded path in a register row, store it once (lane-dense)
    path0 = jnp.where(path_iota == T - 1, idx0, jnp.zeros((1, PATH_P), jnp.int32))

    def back(k, carry):
        idx, row = carry
        t = T - 2 - k
        bprow = bp_scr[t + 1]                                            # (1, P)
        new_idx = jnp.sum(jnp.where(lane_iota == idx, bprow, 0)).astype(jnp.int32)
        row = jnp.where(path_iota == t, new_idx, row)
        return (new_idx, row)

    _, path_row = lax.fori_loop(0, T - 1, back, (idx0, path0))
    path_ref[...] = path_row.reshape(1, 1, PATH_P)


# ----------------------------------------------------------------------------
# Wrapper
# ----------------------------------------------------------------------------
def bilstm_crf_forward(sentences, p):
    B, T = sentences.shape
    TAG = p['transitions'].shape[0]
    H2 = p['w_hh_f'].shape[1]
    E = p['emb_table'].shape[1]
    G = 4 * H2
    BP = ((B + 7) // 8) * 8
    PATH_P = max(128, ((T + 127) // 128) * 128)

    # embedding gather + layout prep (plain-JAX glue)
    emb = p['emb_table'][sentences].astype(jnp.float32)                  # (B, T, E)
    emb_tm = jnp.transpose(emb, (1, 0, 2))                               # (T, B, E)
    emb_pad = jnp.zeros((T, BP, E), jnp.float32).at[:, :B, :].set(emb_tm)

    def reorder_rows(w):   # (4*H2, X) gate row blocks [i,f,g,o] -> [i,f,o,g]
        return jnp.concatenate([w[:H2], w[H2:2 * H2], w[3 * H2:4 * H2], w[2 * H2:3 * H2]],
                               axis=0)

    def prep_dir(w_ih, w_hh, b_ih, b_hh):
        wih = reorder_rows(w_ih).T                                        # (E, 4*H2)
        whh = reorder_rows(w_hh).T                                        # (H2, 4*H2)
        b = reorder_rows((b_ih + b_hh).reshape(4 * H2, 1)).reshape(1, 4 * H2)
        return wih, whh, b

    wih_f, whh_f, b_f = prep_dir(p['w_ih_f'], p['w_hh_f'], p['b_ih_f'], p['b_hh_f'])
    wih_b, whh_b, b_b = prep_dir(p['w_ih_b'], p['w_hh_b'], p['b_ih_b'], p['b_hh_b'])

    wt = p['w_tag'].T                                                     # (H, TAG)
    wtag_f = jnp.zeros((H2, TAG_PAD), jnp.float32).at[:, :TAG].set(wt[:H2])
    wtag_b = jnp.zeros((H2, TAG_PAD), jnp.float32).at[:, :TAG].set(wt[H2:])
    btag = jnp.full((1, TAG_PAD), EMISSION_PAD, jnp.float32).at[0, :TAG].set(p['b_tag'])

    h0 = jnp.zeros((2, BP, H2), jnp.float32).at[:, :B, :].set(p['h0'])
    c0 = jnp.zeros((2, BP, H2), jnp.float32).at[:, :B, :].set(p['c0'])

    logits_flat = pl.pallas_call(
        bilstm_tag_kernel,
        out_shape=jax.ShapeDtypeStruct((T * BP, TAG_PAD), jnp.float32),
        scratch_shapes=[pltpu.VMEM((T, BP, G), jnp.float32),
                        pltpu.VMEM((T, BP, G), jnp.float32),
                        pltpu.VMEM((T, BP, H2), jnp.float32),
                        pltpu.VMEM((T, BP, H2), jnp.float32)],
    )(emb_pad, wih_f, b_f, wih_b, b_b, whh_f, whh_b, h0, c0, wtag_f, wtag_b, btag)

    logits_pad = jnp.transpose(logits_flat.reshape(T, BP, TAG_PAD)[:, :B, :],
                               (1, 0, 2))                                 # (B, T, 128)
    logits = logits_pad[:, :, :TAG]                                       # (B, T, TAG)

    trans_pad = jnp.zeros((TAG_PAD, TAG_PAD), jnp.float32).at[:TAG, :TAG].set(p['transitions'])
    vit_em = logits_pad[:, :, None, :]                                    # (B, T, 1, 128)

    score, path = pl.pallas_call(
        viterbi_kernel,
        out_shape=(jax.ShapeDtypeStruct((B, 1, 1), jnp.float32),
                   jax.ShapeDtypeStruct((B, 1, PATH_P), jnp.int32)),
        grid_spec=pltpu.PrefetchScalarGridSpec(
            num_scalar_prefetch=0,
            grid=(B,),
            in_specs=[pl.BlockSpec((1, T, 1, TAG_PAD), lambda b: (b, 0, 0, 0)),
                      pl.BlockSpec((TAG_PAD, TAG_PAD), lambda b: (0, 0))],
            out_specs=[pl.BlockSpec((1, 1, 1), lambda b: (b, 0, 0)),
                       pl.BlockSpec((1, 1, PATH_P), lambda b: (b, 0, 0))],
            scratch_shapes=[pltpu.VMEM((T, 1, TAG_PAD), jnp.int32)]),
        compiler_params=pltpu.CompilerParams(dimension_semantics=("parallel",)),
    )(vit_em, trans_pad)

    return score.reshape(B), path[:, 0, :T], logits


# ----------------------------------------------------------------------------
# Deterministic parameter construction (synthetic; matches module __init__ shapes)
# ----------------------------------------------------------------------------
def build_params(key, vocab, embed, hidden, batch, num_tags):
    H2 = hidden // 2
    ks = jax.random.split(key, 16)

    def rn(k, shape, scale):
        return (jax.random.normal(k, shape, dtype=jnp.float32) * scale)

    trans = jax.random.normal(ks[11], (num_tags, num_tags), dtype=jnp.float32)
    trans = trans.at[:, TAG_MAP[START_TAG]].set(-1000.0)
    trans = trans.at[TAG_MAP[STOP_TAG], :].set(-1000.0)

    return {
        'emb_table': rn(ks[0], (vocab, embed), 1.0),
        'w_ih_f': rn(ks[1], (4 * H2, embed), 0.3),
        'w_hh_f': rn(ks[2], (4 * H2, H2), 0.3),
        'b_ih_f': rn(ks[3], (4 * H2,), 0.3),
        'b_hh_f': rn(ks[4], (4 * H2,), 0.3),
        'w_ih_b': rn(ks[5], (4 * H2, embed), 0.3),
        'w_hh_b': rn(ks[6], (4 * H2, H2), 0.3),
        'b_ih_b': rn(ks[7], (4 * H2,), 0.3),
        'b_hh_b': rn(ks[8], (4 * H2,), 0.3),
        'w_tag': rn(ks[9], (num_tags, hidden), 0.3),
        'b_tag': rn(ks[10], (num_tags,), 0.3),
        'transitions': trans,
        'h0': rn(ks[12], (2, batch, H2), 1.0),
        'c0': rn(ks[13], (2, batch, H2), 1.0),
    }


# ----------------------------------------------------------------------------
# Pure numpy reference (mirrors PyTorch forward semantics)
# ----------------------------------------------------------------------------
def reference_forward(sentences, p):
    P = {k: np.asarray(v) for k, v in p.items()}
    sent = np.asarray(sentences)
    B, T = sent.shape
    H2 = P['w_hh_f'].shape[1]
    emb = P['emb_table'][sent]                       # (B, T, E)

    def sigm(z):
        return 1.0 / (1.0 + np.exp(-z))

    def run_dir(wih, whh, bih, bhh, h0, c0, reverse):
        h, c = h0.copy(), c0.copy()
        outs = np.zeros((T, B, H2), np.float32)
        order = range(T - 1, -1, -1) if reverse else range(T)
        for t in order:
            x = emb[:, t, :]
            g = x @ wih.T + h @ whh.T + bih + bhh
            i = sigm(g[:, :H2]); f = sigm(g[:, H2:2 * H2])
            gg = np.tanh(g[:, 2 * H2:3 * H2]); o = sigm(g[:, 3 * H2:4 * H2])
            c = f * c + i * gg
            h = o * np.tanh(c)
            outs[t] = h
        return outs

    out_f = run_dir(P['w_ih_f'], P['w_hh_f'], P['b_ih_f'], P['b_hh_f'],
                    P['h0'][0], P['c0'][0], False)
    out_b = run_dir(P['w_ih_b'], P['w_hh_b'], P['b_ih_b'], P['b_hh_b'],
                    P['h0'][1], P['c0'][1], True)
    lstm_out = np.transpose(np.concatenate([out_f, out_b], axis=-1), (1, 0, 2))  # (B,T,H)
    logits = lstm_out @ P['w_tag'].T + P['b_tag']
    trans = P['transitions']

    scores, paths = [], []
    for b in range(B):
        lg = logits[b]
        trellis = np.zeros_like(lg)
        bp = np.zeros(lg.shape, np.int64)
        trellis[0] = lg[0]
        for t in range(1, T):
            v = trellis[t - 1][:, None] + trans
            trellis[t] = lg[t] + v.max(0)
            bp[t] = v.argmax(0)
        path = [int(trellis[-1].argmax())]
        for r in reversed(bp[1:]):
            path.append(int(r[path[-1]]))
        path.reverse()
        scores.append(float(trellis[-1].max()))
        paths.append(path)
    return np.asarray(scores, np.float32), np.asarray(paths, np.int64), logits


if __name__ == "__main__":
    # small shapes consistent with the module: batch=2, seq=8, vocab=20,
    # embedding_dim=16, hidden_dim=32, tag_size=25
    B, T, V, E, H = 2, 8, 20, 16, 32
    key = jax.random.PRNGKey(0)
    params = build_params(key, vocab=V, embed=E, hidden=H, batch=B, num_tags=NUM_TAGS)
    sentences = jax.random.randint(jax.random.PRNGKey(1), (B, T), 0, V, dtype=jnp.int32)

    score, path, logits = bilstm_crf_forward(sentences, params)
    jax.block_until_ready((score, path, logits))

    ref_score, ref_path, ref_logits = reference_forward(sentences, params)
    np.testing.assert_allclose(np.asarray(logits), ref_logits, atol=2e-2, rtol=2e-2)
    np.testing.assert_allclose(np.asarray(score), ref_score, atol=2e-2, rtol=2e-2)
    assert np.array_equal(np.asarray(path), ref_path), (np.asarray(path), ref_path)

    print("KERNEL_OK")
</pallas_src>

<mosaic_0001>
module attributes {stable_mosaic.version = 11 : i64} {
  func.func @bilstm_tag_kernel(%arg0: memref<8x8x16xf32, #tpu.memory_space<vmem>>, %arg1: memref<16x64xf32, #tpu.memory_space<vmem>>, %arg2: memref<1x64xf32, #tpu.memory_space<vmem>>, %arg3: memref<16x64xf32, #tpu.memory_space<vmem>>, %arg4: memref<1x64xf32, #tpu.memory_space<vmem>>, %arg5: memref<16x64xf32, #tpu.memory_space<vmem>>, %arg6: memref<16x64xf32, #tpu.memory_space<vmem>>, %arg7: memref<2x8x16xf32, #tpu.memory_space<vmem>>, %arg8: memref<2x8x16xf32, #tpu.memory_space<vmem>>, %arg9: memref<16x128xf32, #tpu.memory_space<vmem>>, %arg10: memref<16x128xf32, #tpu.memory_space<vmem>>, %arg11: memref<1x128xf32, #tpu.memory_space<vmem>>, %arg12: memref<64x128xf32, #tpu.memory_space<vmem>>, %arg13: memref<8x8x64xf32, #tpu.memory_space<vmem>>, %arg14: memref<8x8x64xf32, #tpu.memory_space<vmem>>, %arg15: memref<8x8x16xf32, #tpu.memory_space<vmem>>, %arg16: memref<8x8x16xf32, #tpu.memory_space<vmem>>) attributes {dimension_semantics = [], scalar_prefetch = 0 : i64, scratch_operands = 4 : i64, tpu.core_type = #tpu.core_type<tc>} {
    %c0 = arith.constant 0 : index
    %c0_0 = arith.constant 0 : index
    %c0_1 = arith.constant 0 : index
    %0 = vector.load %arg0[%c0, %c0_0, %c0_1] : memref<8x8x16xf32, #tpu.memory_space<vmem>>, vector<8x8x16xf32>
    %1 = vector.shape_cast %0 : vector<8x8x16xf32> to vector<64x16xf32>
    %c0_2 = arith.constant 0 : index
    %c0_3 = arith.constant 0 : index
    %2 = vector.load %arg1[%c0_2, %c0_3] : memref<16x64xf32, #tpu.memory_space<vmem>>, vector<16x64xf32>
    %cst = arith.constant dense<0.000000e+00> : vector<64x64xf32>
    %3 = tpu.matmul %1, %2, %cst {dimension_numbers = #tpu.dot_dimension_numbers<[1], [0], [0], [1], [0, 0, 1, 1], [], []>} : vector<64x16xf32>, vector<16x64xf32>, vector<64x64xf32> -> vector<64x64xf32>
    %c0_4 = arith.constant 0 : index
    %c0_5 = arith.constant 0 : index
    %4 = vector.load %arg2[%c0_4, %c0_5] : memref<1x64xf32, #tpu.memory_space<vmem>>, vector<1x64xf32>
    %5 = vector.broadcast %4 : vector<1x64xf32> to vector<64x64xf32>
    %6 = arith.addf %3, %5 : vector<64x64xf32>
    %c0_6 = arith.constant 0 : index
    %c0_7 = arith.constant 0 : index
    %7 = vector.load %arg3[%c0_6, %c0_7] : memref<16x64xf32, #tpu.memory_space<vmem>>, vector<16x64xf32>
    %cst_8 = arith.constant dense<0.000000e+00> : vector<64x64xf32>
    %8 = tpu.matmul %1, %7, %cst_8 {dimension_numbers = #tpu.dot_dimension_numbers<[1], [0], [0], [1], [0, 0, 1, 1], [], []>} : vector<64x16xf32>, vector<16x64xf32>, vector<64x64xf32> -> vector<64x64xf32>
    %c0_9 = arith.constant 0 : index
    %c0_10 = arith.constant 0 : index
    %9 = vector.load %arg4[%c0_9, %c0_10] : memref<1x64xf32, #tpu.memory_space<vmem>>, vector<1x64xf32>
    %10 = vector.broadcast %9 : vector<1x64xf32> to vector<64x64xf32>
    %11 = arith.addf %8, %10 : vector<64x64xf32>
    %12 = vector.shape_cast %6 : vector<64x64xf32> to vector<8x8x64xf32>
    %c0_11 = arith.constant 0 : index
    %c0_12 = arith.constant 0 : index
    %c0_13 = arith.constant 0 : index
    %13 = vector.load %arg13[%c0_11, %c0_12, %c0_13] : memref<8x8x64xf32, #tpu.memory_space<vmem>>, vector<8x8x64xf32>
    tpu.vector_store %arg13[%c0_11, %c0_12, %c0_13], %12 {strides = array<i32>} : memref<8x8x64xf32, #tpu.memory_space<vmem>>, vector<8x8x64xf32>,
    %14 = vector.shape_cast %11 : vector<64x64xf32> to vector<8x8x64xf32>
    %c0_14 = arith.constant 0 : index
    %c0_15 = arith.constant 0 : index
    %c0_16 = arith.constant 0 : index
    %15 = vector.load %arg14[%c0_14, %c0_15, %c0_16] : memref<8x8x64xf32, #tpu.memory_space<vmem>>, vector<8x8x64xf32>
    tpu.vector_store %arg14[%c0_14, %c0_15, %c0_16], %14 {strides = array<i32>} : memref<8x8x64xf32, #tpu.memory_space<vmem>>, vector<8x8x64xf32>,
    %c0_17 = arith.constant 0 : index
    %c0_18 = arith.constant 0 : index
    %16 = vector.load %arg5[%c0_17, %c0_18] : memref<16x64xf32, #tpu.memory_space<vmem>>, vector<16x64xf32>
    %c0_19 = arith.constant 0 : index
    %c0_20 = arith.constant 0 : index
    %17 = vector.load %arg6[%c0_19, %c0_20] : memref<16x64xf32, #tpu.memory_space<vmem>>, vector<16x64xf32>
    %c0_21 = arith.constant 0 : index
    %c0_22 = arith.constant 0 : index
    %c0_23 = arith.constant 0 : index
    %18 = vector.load %arg7[%c0_21, %c0_22, %c0_23] : memref<2x8x16xf32, #tpu.memory_space<vmem>>, vector<1x8x16xf32>
    %19 = vector.shape_cast %18 : vector<1x8x16xf32> to vector<8x16xf32>
    %c0_24 = arith.constant 0 : index
    %c0_25 = arith.constant 0 : index
    %c0_26 = arith.constant 0 : index
    %20 = vector.load %arg8[%c0_24, %c0_25, %c0_26] : memref<2x8x16xf32, #tpu.memory_space<vmem>>, vector<1x8x16xf32>
    %21 = vector.shape_cast %20 : vector<1x8x16xf32> to vector<8x16xf32>
    %c0_i32 = arith.constant 0 : i32
    %c8_i32 = arith.constant 8 : i32
    %22 = arith.addi %c0_i32, %c8_i32 : i32
    %c1_i32 = arith.constant 1 : i32
    %23:2 = scf.for %arg17 = %c0_i32 to %22 step %c1_i32 iter_args(%arg18 = %19, %arg19 = %21) -> (vector<8x16xf32>, vector<8x16xf32>)  : i32 {
      %43 = arith.index_cast %arg17 : i32 to index
      %c0_53 = arith.constant 0 : index
      %c0_54 = arith.constant 0 : index
      %44 = vector.load %arg13[%43, %c0_53, %c0_54] : memref<8x8x64xf32, #tpu.memory_space<vmem>>, vector<1x8x64xf32>
      %45 = vector.shape_cast %44 : vector<1x8x64xf32> to vector<8x64xf32>
      %cst_55 = arith.constant dense<0.000000e+00> : vector<8x64xf32>
      %46 = tpu.matmul %arg18, %16, %cst_55 {dimension_numbers = #tpu.dot_dimension_numbers<[1], [0], [0], [1], [0, 0, 1, 1], [], []>} : vector<8x16xf32>, vector<16x64xf32>, vector<8x64xf32> -> vector<8x64xf32>
      %47 = arith.addf %45, %46 : vector<8x64xf32>
      %48 = vector.extract_strided_slice %47 {offsets = [0, 0], sizes = [8, 48], strides = [1, 1]} : vector<8x64xf32> to vector<8x48xf32>
      %cst_56 = arith.constant 0.000000e+00 : f32
      %49 = vector.broadcast %cst_56 : f32 to vector<8x48xf32>
      %50 = arith.subf %49, %48 : vector<8x48xf32>
      %51 = math.exp %50 : vector<8x48xf32>
      %cst_57 = arith.constant 1.000000e+00 : f32
      %52 = vector.broadcast %cst_57 : f32 to vector<8x48xf32>
      %53 = arith.addf %52, %51 : vector<8x48xf32>
      %cst_58 = arith.constant 1.000000e+00 : f32
      %54 = vector.broadcast %cst_58 : f32 to vector<8x48xf32>
      %55 = arith.divf %54, %53 : vector<8x48xf32>
      %56 = vector.extract_strided_slice %55 {offsets = [0, 0], sizes = [8, 16], strides = [1, 1]} : vector<8x48xf32> to vector<8x16xf32>
      %57 = vector.extract_strided_slice %55 {offsets = [0, 16], sizes = [8, 16], strides = [1, 1]} : vector<8x48xf32> to vector<8x16xf32>
      %58 = vector.extract_strided_slice %55 {offsets = [0, 32], sizes = [8, 16], strides = [1, 1]} : vector<8x48xf32> to vector<8x16xf32>
      %59 = vector.extract_strided_slice %47 {offsets = [0, 48], sizes = [8, 16], strides = [1, 1]} : vector<8x64xf32> to vector<8x16xf32>
      %60 = math.tanh %59 : vector<8x16xf32>
      %61 = arith.mulf %57, %arg19 : vector<8x16xf32>
      %62 = arith.mulf %56, %60 : vector<8x16xf32>
      %63 = arith.addf %61, %62 : vector<8x16xf32>
      %64 = math.tanh %63 : vector<8x16xf32>
      %65 = arith.mulf %58, %64 : vector<8x16xf32>
      %66 = arith.index_cast %arg17 : i32 to index
      %c0_59 = arith.constant 0 : index
      %c0_60 = arith.constant 0 : index
      %67 = vector.load %arg15[%66, %c0_59, %c0_60] : memref<8x8x16xf32, #tpu.memory_space<vmem>>, vector<1x8x16xf32>
      %68 = vector.shape_cast %67 : vector<1x8x16xf32> to vector<8x16xf32>
      %69 = vector.shape_cast %65 : vector<8x16xf32> to vector<1x8x16xf32>
      tpu.vector_store %arg15[%66, %c0_59, %c0_60], %69 {strides = array<i32>} : memref<8x8x16xf32, #tpu.memory_space<vmem>>, vector<1x8x16xf32>,
      scf.yield %65, %63 : vector<8x16xf32>, vector<8x16xf32>
    }
    %c8_i32_27 = arith.constant 8 : i32
    %c1 = arith.constant 1 : index
    %c0_28 = arith.constant 0 : index
    %c0_29 = arith.constant 0 : index
    %24 = vector.load %arg7[%c1, %c0_28, %c0_29] : memref<2x8x16xf32, #tpu.memory_space<vmem>>, vector<1x8x16xf32>
    %25 = vector.shape_cast %24 : vector<1x8x16xf32> to vector<8x16xf32>
    %c1_30 = arith.constant 1 : index
    %c0_31 = arith.constant 0 : index
    %c0_32 = arith.constant 0 : index
    %26 = vector.load %arg8[%c1_30, %c0_31, %c0_32] : memref<2x8x16xf32, #tpu.memory_space<vmem>>, vector<1x8x16xf32>
    %27 = vector.shape_cast %26 : vector<1x8x16xf32> to vector<8x16xf32>
    %c0_i32_33 = arith.constant 0 : i32
    %c8_i32_34 = arith.constant 8 : i32
    %28 = arith.addi %c0_i32_33, %c8_i32_34 : i32
    %c1_i32_35 = arith.constant 1 : i32
    %29:2 = scf.for %arg17 = %c0_i32_33 to %28 step %c1_i32_35 iter_args(%arg18 = %25, %arg19 = %27) -> (vector<8x16xf32>, vector<8x16xf32>)  : i32 {
      %c7_i32 = arith.constant 7 : i32
      %43 = arith.subi %c7_i32, %arg17 : i32
      %44 = arith.index_cast %43 : i32 to index
      %c0_53 = arith.constant 0 : index
      %c0_54 = arith.constant 0 : index
      %45 = vector.load %arg14[%44, %c0_53, %c0_54] : memref<8x8x64xf32, #tpu.memory_space<vmem>>, vector<1x8x64xf32>
      %46 = vector.shape_cast %45 : vector<1x8x64xf32> to vector<8x64xf32>
      %cst_55 = arith.constant dense<0.000000e+00> : vector<8x64xf32>
      %47 = tpu.matmul %arg18, %17, %cst_55 {dimension_numbers = #tpu.dot_dimension_numbers<[1], [0], [0], [1], [0, 0, 1, 1], [], []>} : vector<8x16xf32>, vector<16x64xf32>, vector<8x64xf32> -> vector<8x64xf32>
      %48 = arith.addf %46, %47 : vector<8x64xf32>
      %49 = vector.extract_strided_slice %48 {offsets = [0, 0], sizes = [8, 48], strides = [1, 1]} : vector<8x64xf32> to vector<8x48xf32>
      %cst_56 = arith.constant 0.000000e+00 : f32
      %50 = vector.broadcast %cst_56 : f32 to vector<8x48xf32>
      %51 = arith.subf %50, %49 : vector<8x48xf32>
      %52 = math.exp %51 : vector<8x48xf32>
      %cst_57 = arith.constant 1.000000e+00 : f32
      %53 = vector.broadcast %cst_57 : f32 to vector<8x48xf32>
      %54 = arith.addf %53, %52 : vector<8x48xf32>
      %cst_58 = arith.constant 1.000000e+00 : f32
      %55 = vector.broadcast %cst_58 : f32 to vector<8x48xf32>
      %56 = arith.divf %55, %54 : vector<8x48xf32>
      %57 = vector.extract_strided_slice %56 {offsets = [0, 0], sizes = [8, 16], strides = [1, 1]} : vector<8x48xf32> to vector<8x16xf32>
      %58 = vector.extract_strided_slice %56 {offsets = [0, 16], sizes = [8, 16], strides = [1, 1]} : vector<8x48xf32> to vector<8x16xf32>
      %59 = vector.extract_strided_slice %56 {offsets = [0, 32], sizes = [8, 16], strides = [1, 1]} : vector<8x48xf32> to vector<8x16xf32>
      %60 = vector.extract_strided_slice %48 {offsets = [0, 48], sizes = [8, 16], strides = [1, 1]} : vector<8x64xf32> to vector<8x16xf32>
      %61 = math.tanh %60 : vector<8x16xf32>
      %62 = arith.mulf %58, %arg19 : vector<8x16xf32>
      %63 = arith.mulf %57, %61 : vector<8x16xf32>
      %64 = arith.addf %62, %63 : vector<8x16xf32>
      %65 = math.tanh %64 : vector<8x16xf32>
      %66 = arith.mulf %59, %65 : vector<8x16xf32>
      %67 = arith.index_cast %43 : i32 to index
      %c0_59 = arith.constant 0 : index
      %c0_60 = arith.constant 0 : index
      %68 = vector.load %arg16[%67, %c0_59, %c0_60] : memref<8x8x16xf32, #tpu.memory_space<vmem>>, vector<1x8x16xf32>
      %69 = vector.shape_cast %68 : vector<1x8x16xf32> to vector<8x16xf32>
      %70 = vector.shape_cast %66 : vector<8x16xf32> to vector<1x8x16xf32>
      tpu.vector_store %arg16[%67, %c0_59, %c0_60], %70 {strides = array<i32>} : memref<8x8x16xf32, #tpu.memory_space<vmem>>, vector<1x8x16xf32>,
      scf.yield %66, %64 : vector<8x16xf32>, vector<8x16xf32>
    }
    %c8_i32_36 = arith.constant 8 : i32
    %c0_37 = arith.constant 0 : index
    %c0_38 = arith.constant 0 : index
    %c0_39 = arith.constant 0 : index
    %30 = vector.load %arg15[%c0_37, %c0_38, %c0_39] : memref<8x8x16xf32, #tpu.memory_space<vmem>>, vector<8x8x16xf32>
    %31 = vector.shape_cast %30 : vector<8x8x16xf32> to vector<64x16xf32>
    %c0_40 = arith.constant 0 : index
    %c0_41 = arith.constant 0 : index
    %c0_42 = arith.constant 0 : index
    %32 = vector.load %arg16[%c0_40, %c0_41, %c0_42] : memref<8x8x16xf32, #tpu.memory_space<vmem>>, vector<8x8x16xf32>
    %33 = vector.shape_cast %32 : vector<8x8x16xf32> to vector<64x16xf32>
    %c0_43 = arith.constant 0 : index
    %c0_44 = arith.constant 0 : index
    %34 = vector.load %arg9[%c0_43, %c0_44] : memref<16x128xf32, #tpu.memory_space<vmem>>, vector<16x128xf32>
    %cst_45 = arith.constant dense<0.000000e+00> : vector<64x128xf32>
    %35 = tpu.matmul %31, %34, %cst_45 {dimension_numbers = #tpu.dot_dimension_numbers<[1], [0], [0], [1], [0, 0, 1, 1], [], []>} : vector<64x16xf32>, vector<16x128xf32>, vector<64x128xf32> -> vector<64x128xf32>
    %c0_46 = arith.constant 0 : index
    %c0_47 = arith.constant 0 : index
    %36 = vector.load %arg10[%c0_46, %c0_47] : memref<16x128xf32, #tpu.memory_space<vmem>>, vector<16x128xf32>
    %cst_48 = arith.constant dense<0.000000e+00> : vector<64x128xf32>
    %37 = tpu.matmul %33, %36, %cst_48 {dimension_numbers = #tpu.dot_dimension_numbers<[1], [0], [0], [1], [0, 0, 1, 1], [], []>} : vector<64x16xf32>, vector<16x128xf32>, vector<64x128xf32> -> vector<64x128xf32>
    %38 = arith.addf %35, %37 : vector<64x128xf32>
    %c0_49 = arith.constant 0 : index
    %c0_50 = arith.constant 0 : index
    %39 = vector.load %arg11[%c0_49, %c0_50] : memref<1x128xf32, #tpu.memory_space<vmem>>, vector<1x128xf32>
    %40 = vector.broadcast %39 : vector<1x128xf32> to vector<64x128xf32>
    %41 = arith.addf %38, %40 : vector<64x128xf32>
    %c0_51 = arith.constant 0 : index
    %c0_52 = arith.constant 0 : index
    %42 = vector.load %arg12[%c0_51, %c0_52] : memref<64x128xf32, #tpu.memory_space<vmem>>, vector<64x128xf32>
    tpu.vector_store %arg12[%c0_51, %c0_52], %41 {strides = array<i32>} : memref<64x128xf32, #tpu.memory_space<vmem>>, vector<64x128xf32>,
    return
  }
}

</mosaic_0001>

<llo_original>
// kernel: tpu_custom_call.1
$region0: #{tpu_custom_call.1}
  #allocation0 [shape = 'u32[]', space=smem, size = 0x4, offset = 0x4, fixed_abs, tag = 'smem constant byte address 0x4 - core index']
  #allocation1 [shape = 'u32[144,128]{1,0:T(1,128)}', space=vmem, size = 0x12000, scoped, tag = 'internal scratch']
  #allocation2 [shape = 'f32[8,8,64]{2,1,0:T(8,128)}', space=vmem, size = 0x8000, scoped, tag = 'scratch operand']
  #allocation3 [shape = 'f32[8,8,64]{2,1,0:T(8,128)}', space=vmem, size = 0x8000, scoped, tag = 'scratch operand']
  #allocation4 [shape = 'f32[8,8,16]{2,1,0:T(8,128)}', space=vmem, size = 0x8000, scoped, tag = 'scratch operand']
  #allocation5 [shape = 'f32[8,8,16]{2,1,0:T(8,128)}', space=vmem, size = 0x8000, scoped, tag = 'scratch operand']
  %s0 = inlined_call_operand.hbm [shape: f32[8,8,16], index: 0, kind: input, shape index: {}]
  %s1 = inlined_call_operand.hbm [shape: f32[16,64], index: 1, kind: input, shape index: {}]
  %s2 = inlined_call_operand.vmem [shape: f32[1,64], index: 2, kind: input, shape index: {}]
  %s3 = inlined_call_operand.hbm [shape: f32[16,64], index: 3, kind: input, shape index: {}]
  %s4 = inlined_call_operand.vmem [shape: f32[1,64], index: 4, kind: input, shape index: {}]
  %s5 = inlined_call_operand.vmem [shape: f32[16,64], index: 5, kind: input, shape index: {}]
  %s6 = inlined_call_operand.hbm [shape: f32[16,64], index: 6, kind: input, shape index: {}]
  %s7 = inlined_call_operand.hbm [shape: f32[2,8,16], index: 7, kind: input, shape index: {}]
  %s8 = inlined_call_operand.hbm [shape: f32[2,8,16], index: 8, kind: input, shape index: {}]
  %s9 = inlined_call_operand.vmem [shape: f32[16,128], index: 9, kind: input, shape index: {}]
  %s10 = inlined_call_operand.hbm [shape: f32[16,128], index: 10, kind: input, shape index: {}]
  %s11 = inlined_call_operand.vmem [shape: f32[1,128], index: 11, kind: input, shape index: {}]
  %s12 = inlined_call_operand.hbm [shape: f32[64,128], index: 12, kind: output, shape index: {}]
  %s13 = sld [smem:[#allocation0]]
  $region100: #{tpu_custom_call.1} parent=0
    _
  %s15 = ssub.s32 1, %s13
  %s16 = scalar_select 0, %s15, %s13
  $region1: #{tpu_custom_call.1} parent=0
    #allocation6 [shape = 'u8[32768]{0}', space=vmem, size = 0x8000, scoped, tag = 'input window, operand 0, single buffered']
    #allocation7 [shape = 's32[1]{0}', space=sflag, size = 0x4, scoped, tag = 'scoped memory for tpu_custom_call.1']
    #allocation8 [shape = 's32[1]{0}', space=sflag, size = 0x4, scoped, tag = 'scoped memory for tpu_custom_call.1']
    #allocation9 [shape = 'u8[8192]{0}', space=vmem, size = 0x2000, scoped, tag = 'input window, operand 1, single buffered']
    #allocation10 [shape = 's32[1]{0}', space=sflag, size = 0x4, scoped, tag = 'scoped memory for tpu_custom_call.1']
    #allocation11 [shape = 'u8[8192]{0}', space=vmem, size = 0x2000, scoped, tag = 'input window, operand 3, single buffered']
    #allocation12 [shape = 'u8[8192]{0}', space=vmem, size = 0x2000, scoped, tag = 'input window, operand 6, single buffered']
    #allocation13 [shape = 's32[1]{0}', space=sflag, size = 0x4, scoped, tag = 'scoped memory for tpu_custom_call.1']
    #allocation14 [shape = 'u8[8192]{0}', space=vmem, size = 0x2000, scoped, tag = 'input window, operand 7, single buffered']
    #allocation15 [shape = 'u8[8192]{0}', space=vmem, size = 0x2000, scoped, tag = 'input window, operand 8, single buffered']
    #allocation16 [shape = 's32[1]{0}', space=sflag, size = 0x4, scoped, tag = 'scoped memory for tpu_custom_call.1']
    #allocation17 [shape = 'u8[8192]{0}', space=vmem, size = 0x2000, scoped, tag = 'input window, operand 10, single buffered']
    #allocation18 [shape = 'u8[32768]{0}', space=vmem, size = 0x8000, scoped, tag = 'output window, operand 0, single buffered']
    %17 = vsyncpa [#allocation7], 0
    %18 = vsyncpa [#allocation10], 0
    %19 = vsyncpa [#allocation13], 0
    %20 = vsyncpa [#allocation16], 0
    %21 = vsyncpa [#allocation8], 0
    // Predicated region
    $region2: #{tpu_custom_call.1} parent=1 // pred_check
      _
    $region3: #{tpu_custom_call.1} parent=1 // pred_check_branch
      %23 = sbr.rel (0) target = $region5
    $region4: #{tpu_custom_call.1} parent=1 // pred_region
      %s25 = ssub.s32 1024, 1024
      %26 = vsyncadd [#allocation7], %s25
      %s27 = sshll.u32 [#allocation6], 4
      %s28 = int_to_ptr.vmem [resolvable:$true] %s27
      %33 = dma.hbm_to_vmem [thread:$0]  %s0, 1024, %s28, [#allocation7], 128, 128, 8
    $region5: #{tpu_custom_call.1} parent=1 // pred_fallthru
      _
    // Predicated region
    $region6: #{tpu_custom_call.1} parent=1 // pred_check
      _
    $region7: #{tpu_custom_call.1} parent=1 // pred_check_branch
      %35 = sbr.rel (0) target = $region9
    $region8: #{tpu_custom_call.1} parent=1 // pred_region
      %s37 = ssub.s32 256, 256
      %38 = vsyncadd [#allocation10], %s37
      %s39 = sshll.u32 [#allocation9], 4
      %s40 = int_to_ptr.vmem [resolvable:$true] %s39
      %45 = dma.hbm_to_vmem [thread:$0]  %s1, 256, %s40, [#allocation10], 128, 128, 8
    $region9: #{tpu_custom_call.1} parent=1 // pred_fallthru
      _
    // Predicated region
    $region10: #{tpu_custom_call.1} parent=1 // pred_check
      _
    $region11: #{tpu_custom_call.1} parent=1 // pred_check_branch
      %47 = sbr.rel (0) target = $region13
    $region12: #{tpu_custom_call.1} parent=1 // pred_region
      _
    $region13: #{tpu_custom_call.1} parent=1 // pred_fallthru
      _
    // Predicated region
    $region14: #{tpu_custom_call.1} parent=1 // pred_check
      _
    $region15: #{tpu_custom_call.1} parent=1 // pred_check_branch
      %49 = sbr.rel (0) target = $region17
    $region16: #{tpu_custom_call.1} parent=1 // pred_region
      %s51 = ssub.s32 256, 256
      %52 = vsyncadd [#allocation10], %s51
      %s53 = sshll.u32 [#allocation11], 4
      %s54 = int_to_ptr.vmem [resolvable:$true] %s53
      %59 = dma.hbm_to_vmem [thread:$0]  %s3, 256, %s54, [#allocation10], 128, 128, 8
    $region17: #{tpu_custom_call.1} parent=1 // pred_fallthru
      _
    // Predicated region
    $region18: #{tpu_custom_call.1} parent=1 // pred_check
      _
    $region19: #{tpu_custom_call.1} parent=1 // pred_check_branch
      %61 = sbr.rel (0) target = $region21
    $region20: #{tpu_custom_call.1} parent=1 // pred_region
      _
    $region21: #{tpu_custom_call.1} parent=1 // pred_fallthru
      _
    // Predicated region
    $region22: #{tpu_custom_call.1} parent=1 // pred_check
      _
    $region23: #{tpu_custom_call.1} parent=1 // pred_check_branch
      %63 = sbr.rel (0) target = $region25
    $region24: #{tpu_custom_call.1} parent=1 // pred_region
      _
    $region25: #{tpu_custom_call.1} parent=1 // pred_fallthru
      _
    // Predicated region
    $region26: #{tpu_custom_call.1} parent=1 // pred_check
      _
    $region27: #{tpu_custom_call.1} parent=1 // pred_check_branch
      %65 = sbr.rel (0) target = $region29
    $region28: #{tpu_custom_call.1} parent=1 // pred_region
      %s67 = ssub.s32 256, 256
      %68 = vsyncadd [#allocation13], %s67
      %s69 = sshll.u32 [#allocation12], 4
      %s70 = int_to_ptr.vmem [resolvable:$true] %s69
      %75 = dma.hbm_to_vmem [thread:$0]  %s6, 256, %s70, [#allocation13], 128, 128, 8
    $region29: #{tpu_custom_call.1} parent=1 // pred_fallthru
      _
    // Predicated region
    $region30: #{tpu_custom_call.1} parent=1 // pred_check
      _
    $region31: #{tpu_custom_call.1} parent=1 // pred_check_branch
      %77 = sbr.rel (0) target = $region33
    $region32: #{tpu_custom_call.1} parent=1 // pred_region
      %s79 = ssub.s32 256, 256
      %80 = vsyncadd [#allocation13], %s79
      %s81 = sshll.u32 [#allocation14], 4
      %s82 = int_to_ptr.vmem [resolvable:$true] %s81
      %87 = dma.hbm_to_vmem [thread:$0]  %s7, 256, %s82, [#allocation13], 128, 128, 8
    $region33: #{tpu_custom_call.1} parent=1 // pred_fallthru
      _
    // Predicated region
    $region34: #{tpu_custom_call.1} parent=1 // pred_check
      _
    $region35: #{tpu_custom_call.1} parent=1 // pred_check_branch
      %89 = sbr.rel (0) target = $region37
    $region36: #{tpu_custom_call.1} parent=1 // pred_region
      %s91 = ssub.s32 256, 256
      %92 = vsyncadd [#allocation16], %s91
      %s93 = sshll.u32 [#allocation15], 4
      %s94 = int_to_ptr.vmem [resolvable:$true] %s93
      %99 = dma.hbm_to_vmem [thread:$0]  %s8, 256, %s94, [#allocation16], 128, 128, 8
    $region37: #{tpu_custom_call.1} parent=1 // pred_fallthru
      _
    // Predicated region
    $region38: #{tpu_custom_call.1} parent=1 // pred_check
      _
    $region39: #{tpu_custom_call.1} parent=1 // pred_check_branch
      %101 = sbr.rel (0) target = $region41
    $region40: #{tpu_custom_call.1} parent=1 // pred_region
      _
    $region41: #{tpu_custom_call.1} parent=1 // pred_fallthru
      _
    // Predicated region
    $region42: #{tpu_custom_call.1} parent=1 // pred_check
      _
    $region43: #{tpu_custom_call.1} parent=1 // pred_check_branch
      %103 = sbr.rel (0) target = $region45
    $region44: #{tpu_custom_call.1} parent=1 // pred_region
      %s105 = ssub.s32 256, 256
      %106 = vsyncadd [#allocation16], %s105
      %s107 = sshll.u32 [#allocation17], 4
      %s108 = int_to_ptr.vmem [resolvable:$true] %s107
      %113 = dma.hbm_to_vmem [thread:$0]  %s10, 256, %s108, [#allocation16], 128, 128, 8
    $region45: #{tpu_custom_call.1} parent=1 // pred_fallthru
      _
    // Predicated region
    $region46: #{tpu_custom_call.1} parent=1 // pred_check
      _
    $region47: #{tpu_custom_call.1} parent=1 // pred_check_branch
      %115 = sbr.rel (0) target = $region49
    $region48: #{tpu_custom_call.1} parent=1 // pred_region
      _
    $region49: #{tpu_custom_call.1} parent=1 // pred_fallthru
      _
    // Predicated region
    $region50: #{tpu_custom_call.1} parent=1 // pred_check
      _
    $region51: #{tpu_custom_call.1} parent=1 // pred_check_branch
      %117 = sbr.rel (0) target = $region53
    $region52: #{tpu_custom_call.1} parent=1 // pred_region
      %118 = dma.done [#allocation7], 1024
    $region53: #{tpu_custom_call.1} parent=1 // pred_fallthru
      _
    // Predicated region
    $region54: #{tpu_custom_call.1} parent=1 // pred_check
      _
    $region55: #{tpu_custom_call.1} parent=1 // pred_check_branch
      %120 = sbr.rel (0) target = $region57
    $region56: #{tpu_custom_call.1} parent=1 // pred_region
      %121 = dma.done [#allocation10], 256
    $region57: #{tpu_custom_call.1} parent=1 // pred_fallthru
      _
    // Predicated region
    $region58: #{tpu_custom_call.1} parent=1 // pred_check
      _
    $region59: #{tpu_custom_call.1} parent=1 // pred_check_branch
      %123 = sbr.rel (0) target = $region61
    $region60: #{tpu_custom_call.1} parent=1 // pred_region
      %124 = dma.done [#allocation10], 256
    $region61: #{tpu_custom_call.1} parent=1 // pred_fallthru
      _
    // Predicated region
    $region62: #{tpu_custom_call.1} parent=1 // pred_check
      _
    $region63: #{tpu_custom_call.1} parent=1 // pred_check_branch
      %126 = sbr.rel (0) target = $region65
    $region64: #{tpu_custom_call.1} parent=1 // pred_region
      %127 = dma.done [#allocation13], 256
    $region65: #{tpu_custom_call.1} parent=1 // pred_fallthru
      _
    // Predicated region
    $region66: #{tpu_custom_call.1} parent=1 // pred_check
      _
    $region67: #{tpu_custom_call.1} parent=1 // pred_check_branch
      %129 = sbr.rel (0) target = $region69
    $region68: #{tpu_custom_call.1} parent=1 // pred_region
      %130 = dma.done [#allocation13], 256
    $region69: #{tpu_custom_call.1} parent=1 // pred_fallthru
      _
    // Predicated region
    $region70: #{tpu_custom_call.1} parent=1 // pred_check
      _
    $region71: #{tpu_custom_call.1} parent=1 // pred_check_branch
      %132 = sbr.rel (0) target = $region73
    $region72: #{tpu_custom_call.1} parent=1 // pred_region
      %133 = dma.done [#allocation16], 256
    $region73: #{tpu_custom_call.1} parent=1 // pred_fallthru
      _
    // Predicated region
    $region74: #{tpu_custom_call.1} parent=1 // pred_check
      _
    $region75: #{tpu_custom_call.1} parent=1 // pred_check_branch
      %135 = sbr.rel (0) target = $region77
    $region76: #{tpu_custom_call.1} parent=1 // pred_region
      %136 = dma.done [#allocation16], 256
    $region77: #{tpu_custom_call.1} parent=1 // pred_fallthru
      _
    %v137 = vld [vmem:[#allocation6] sm:$0xff]
    %v138 = vld [vmem:[#allocation6 + $0x8] sm:$0xff]
    %v139 = vld [vmem:[#allocation6 + $0x10] sm:$0xff]
    %v140 = vld [vmem:[#allocation6 + $0x18] sm:$0xff]
    %v141 = vld [vmem:[#allocation6 + $0x20] sm:$0xff]
    %v142 = vld [vmem:[#allocation6 + $0x28] sm:$0xff]
    %v143 = vld [vmem:[#allocation6 + $0x30] sm:$0xff]
    %v144 = vld [vmem:[#allocation6 + $0x38] sm:$0xff]
    %v145 = vld [vmem:[#allocation9] sm:$0xff]
    %v146 = vld [vmem:[#allocation9 + $0x8] sm:$0xff]
    %v147 = vld [vmem:[%s2] sm:$0x1]
    %v149 = vlaneseq
    %v150 = vshrl.u32 %v149, 7
    %v151 = vsub.s32 0, %v150
    %v152 = vrot.slane %v147, %v151
    %vm154 = vcmask 130048
    %v156 = vsel %vm154, %v137, 0
    %v159 = vsel %vm154, %v138, 0
    %v162 = vsel %vm154, %v139, 0
    %v165 = vsel %vm154, %v140, 0
    %v168 = vsel %vm154, %v141, 0
    %v171 = vsel %vm154, %v142, 0
    %v174 = vsel %vm154, %v143, 0
    %v177 = vsel %vm154, %v144, 0
    %179 = vmatprep.subr.mxu0 0.0
    %180 = vmatpush1.msra.mxu0 %v145
    %181 = vmatprep.subr.mxu0 0.0
    %182 = vmatpush1.msra.mxu0 %v146
    %183 = vmatprep.subr.mxu0 0.0
    %184 = vmatpush1.msra.mxu0 0.0
    %185 = vmatprep.subr.mxu0 0.0
    %186 = vmatpush1.msra.mxu0 0.0
    %187 = vmatprep.subr.mxu0 0.0
    %188 = vmatpush1.msra.mxu0 0.0
    %189 = vmatprep.subr.mxu0 0.0
    %190 = vmatpush1.msra.mxu0 0.0
    %191 = vmatprep.subr.mxu0 0.0
    %192 = vmatpush1.msra.mxu0 0.0
    %193 = vmatprep.subr.mxu0 0.0
    %194 = vmatpush1.msra.mxu0 0.0
    %195 = vmatprep.subr.mxu0 0.0
    %196 = vmatpush1.msra.mxu0 0.0
    %197 = vmatprep.subr.mxu0 0.0
    %198 = vmatpush1.msra.mxu0 0.0
    %199 = vmatprep.subr.mxu0 0.0
    %200 = vmatpush1.msra.mxu0 0.0
    %201 = vmatprep.subr.mxu0 0.0
    %202 = vmatpush1.msra.mxu0 0.0
    %203 = vmatprep.subr.mxu0 0.0
    %204 = vmatpush1.msra.mxu0 0.0
    %205 = vmatprep.subr.mxu0 0.0
    %206 = vmatpush1.msra.mxu0 0.0
    %207 = vmatprep.subr.mxu0 0.0
    %208 = vmatpush1.msra.mxu0 0.0
    %209 = vmatprep.subr.mxu0 0.0
    %210 = vmatpush1.msra.mxu0 0.0
    %211 = vmatprep.subr.mxu0 0.0
    %212 = vmatpush1.msra.mxu0 0.0
    %213 = vmatprep.subr.mxu0 0.0
    %214 = vmatpush1.msra.mxu0 0.0
    %215 = vmatprep.subr.mxu0 0.0
    %216 = vmatpush1.msra.mxu0 0.0
    %217 = vmatprep.subr.mxu0 0.0
    %218 = vmatpush1.msra.mxu0 0.0
    %219 = vmatprep.subr.mxu0 0.0
    %220 = vmatpush1.msra.mxu0 0.0
    %221 = vmatprep.subr.mxu0 0.0
    %222 = vmatpush1.msra.mxu0 0.0
    %223 = vmatprep.subr.mxu0 0.0
    %224 = vmatpush1.msra.mxu0 0.0
    %225 = vmatprep.subr.mxu0 0.0
    %226 = vmatpush1.msra.mxu0 0.0
    %227 = vmatprep.subr.mxu0 0.0
    %228 = vmatpush1.msra.mxu0 0.0
    %229 = vmatprep.subr.mxu0 0.0
    %230 = vmatpush1.msra.mxu0 0.0
    %231 = vmatprep.subr.mxu0 0.0
    %232 = vmatpush1.msra.mxu0 0.0
    %233 = vmatprep.subr.mxu0 0.0
    %234 = vmatpush1.msra.mxu0 0.0
    %235 = vmatprep.subr.mxu0 0.0
    %236 = vmatpush1.msra.mxu0 0.0
    %237 = vmatprep.subr.mxu0 0.0
    %238 = vmatpush1.msra.mxu0 0.0
    %239 = vmatprep.subr.mxu0 0.0
    %240 = vmatpush1.msra.mxu0 0.0
    %241 = vmatprep.subr.mxu0 0.0
    %242 = vmatpush1.msra.mxu0 0.0
    %243 = vmatprep.mubr.f32.mxu0 0.0
    %244 = vmatmul.mubr.f32.gmra.mrb[0].mxu0 %v156
    %v245 = vpop.f32.mrb[0].mxu0
    %v246 = vadd.f32 %v152, %v245
    %v247 = vpop.f32.mrb[0].mxu0
    %248 = vmatprep.mubr.f32.mxu0 0.0
    %249 = vmatmul.mubr.f32.gmra.mrb[0].mxu0 %v159
    %v250 = vpop.f32.mrb[0].mxu0
    %v251 = vadd.f32 %v152, %v250
    %v252 = vpop.f32.mrb[0].mxu0
    %253 = vmatprep.mubr.f32.mxu0 0.0
    %254 = vmatmul.mubr.f32.gmra.mrb[0].mxu0 %v162
    %v255 = vpop.f32.mrb[0].mxu0
    %v256 = vadd.f32 %v152, %v255
    %v257 = vpop.f32.mrb[0].mxu0
    %258 = vmatprep.mubr.f32.mxu0 0.0
    %259 = vmatmul.mubr.f32.gmra.mrb[0].mxu0 %v165
    %v260 = vpop.f32.mrb[0].mxu0
    %v261 = vadd.f32 %v152, %v260
    %v262 = vpop.f32.mrb[0].mxu0
    %263 = vmatprep.mubr.f32.mxu0 0.0
    %264 = vmatmul.mubr.f32.gmra.mrb[0].mxu0 %v168
    %v265 = vpop.f32.mrb[0].mxu0
    %v266 = vadd.f32 %v152, %v265
    %v267 = vpop.f32.mrb[0].mxu0
    %268 = vmatprep.mubr.f32.mxu0 0.0
    %269 = vmatmul.mubr.f32.gmra.mrb[0].mxu0 %v171
    %v270 = vpop.f32.mrb[0].mxu0
    %v271 = vadd.f32 %v152, %v270
    %v272 = vpop.f32.mrb[0].mxu0
    %273 = vmatprep.mubr.f32.mxu0 0.0
    %274 = vmatmul.mubr.f32.gmra.mrb[0].mxu0 %v174
    %v275 = vpop.f32.mrb[0].mxu0
    %v276 = vadd.f32 %v152, %v275
    %v277 = vpop.f32.mrb[0].mxu0
    %278 = vmatprep.mubr.f32.mxu0 0.0
    %279 = vmatmul.mubr.f32.gmra.mrb[0].mxu0 %v177
    %v280 = vpop.f32.mrb[0].mxu0
    %v281 = vadd.f32 %v152, %v280
    %v282 = vpop.f32.mrb[0].mxu0
    %283 = vdwg.mxu0
    %v284 = vld [vmem:[#allocation11] sm:$0xff]
    %v285 = vld [vmem:[#allocation11 + $0x8] sm:$0xff]
    %v286 = vld [vmem:[%s4] sm:$0x1]
    %v288 = vlaneseq
    %v289 = vshrl.u32 %v288, 7
    %v290 = vsub.s32 0, %v289
    %v291 = vrot.slane %v286, %v290
    %293 = vmatprep.subr.mxu0 0.0
    %294 = vmatpush1.msra.mxu0 %v284
    %295 = vmatprep.subr.mxu0 0.0
    %296 = vmatpush1.msra.mxu0 %v285
    %297 = vmatprep.subr.mxu0 0.0
    %298 = vmatpush1.msra.mxu0 0.0
    %299 = vmatprep.subr.mxu0 0.0
    %300 = vmatpush1.msra.mxu0 0.0
    %301 = vmatprep.subr.mxu0 0.0
    %302 = vmatpush1.msra.mxu0 0.0
    %303 = vmatprep.subr.mxu0 0.0
    %304 = vmatpush1.msra.mxu0 0.0
    %305 = vmatprep.subr.mxu0 0.0
    %306 = vmatpush1.msra.mxu0 0.0
    %307 = vmatprep.subr.mxu0 0.0
    %308 = vmatpush1.msra.mxu0 0.0
    %309 = vmatprep.subr.mxu0 0.0
    %310 = vmatpush1.msra.mxu0 0.0
    %311 = vmatprep.subr.mxu0 0.0
    %312 = vmatpush1.msra.mxu0 0.0
    %313 = vmatprep.subr.mxu0 0.0
    %314 = vmatpush1.msra.mxu0 0.0
    %315 = vmatprep.subr.mxu0 0.0
    %316 = vmatpush1.msra.mxu0 0.0
    %317 = vmatprep.subr.mxu0 0.0
    %318 = vmatpush1.msra.mxu0 0.0
    %319 = vmatprep.subr.mxu0 0.0
    %320 = vmatpush1.msra.mxu0 0.0
    %321 = vmatprep.subr.mxu0 0.0
    %322 = vmatpush1.msra.mxu0 0.0
    %323 = vmatprep.subr.mxu0 0.0
    %324 = vmatpush1.msra.mxu0 0.0
    %325 = vmatprep.subr.mxu0 0.0
    %326 = vmatpush1.msra.mxu0 0.0
    %327 = vmatprep.subr.mxu0 0.0
    %328 = vmatpush1.msra.mxu0 0.0
    %329 = vmatprep.subr.mxu0 0.0
    %330 = vmatpush1.msra.mxu0 0.0
    %331 = vmatprep.subr.mxu0 0.0
    %332 = vmatpush1.msra.mxu0 0.0
    %333 = vmatprep.subr.mxu0 0.0
    %334 = vmatpush1.msra.mxu0 0.0
    %335 = vmatprep.subr.mxu0 0.0
    %336 = vmatpush1.msra.mxu0 0.0
    %337 = vmatprep.subr.mxu0 0.0
    %338 = vmatpush1.msra.mxu0 0.0
    %339 = vmatprep.subr.mxu0 0.0
    %340 = vmatpush1.msra.mxu0 0.0
    %341 = vmatprep.subr.mxu0 0.0
    %342 = vmatpush1.msra.mxu0 0.0
    %343 = vmatprep.subr.mxu0 0.0
    %344 = vmatpush1.msra.mxu0 0.0
    %345 = vmatprep.subr.mxu0 0.0
    %346 = vmatpush1.msra.mxu0 0.0
    %347 = vmatprep.subr.mxu0 0.0
    %348 = vmatpush1.msra.mxu0 0.0
    %349 = vmatprep.subr.mxu0 0.0
    %350 = vmatpush1.msra.mxu0 0.0
    %351 = vmatprep.subr.mxu0 0.0
    %352 = vmatpush1.msra.mxu0 0.0
    %353 = vmatprep.subr.mxu0 0.0
    %354 = vmatpush1.msra.mxu0 0.0
    %355 = vmatprep.subr.mxu0 0.0
    %356 = vmatpush1.msra.mxu0 0.0
    %357 = vmatprep.mubr.f32.mxu0 0.0
    %358 = vmatmul.mubr.f32.gmra.mrb[0].mxu0 %v156
    %v359 = vpop.f32.mrb[0].mxu0
    %v360 = vadd.f32 %v291, %v359
    %v361 = vpop.f32.mrb[0].mxu0
    %362 = vmatprep.mubr.f32.mxu0 0.0
    %363 = vmatmul.mubr.f32.gmra.mrb[0].mxu0 %v159
    %v364 = vpop.f32.mrb[0].mxu0
    %v365 = vadd.f32 %v291, %v364
    %v366 = vpop.f32.mrb[0].mxu0
    %367 = vmatprep.mubr.f32.mxu0 0.0
    %368 = vmatmul.mubr.f32.gmra.mrb[0].mxu0 %v162
    %v369 = vpop.f32.mrb[0].mxu0
    %v370 = vadd.f32 %v291, %v369
    %v371 = vpop.f32.mrb[0].mxu0
    %372 = vmatprep.mubr.f32.mxu0 0.0
    %373 = vmatmul.mubr.f32.gmra.mrb[0].mxu0 %v165
    %v374 = vpop.f32.mrb[0].mxu0
    %v375 = vadd.f32 %v291, %v374
    %v376 = vpop.f32.mrb[0].mxu0
    %377 = vmatprep.mubr.f32.mxu0 0.0
    %378 = vmatmul.mubr.f32.gmra.mrb[0].mxu0 %v168
    %v379 = vpop.f32.mrb[0].mxu0
    %v380 = vadd.f32 %v291, %v379
    %v381 = vpop.f32.mrb[0].mxu0
    %382 = vmatprep.mubr.f32.mxu0 0.0
    %383 = vmatmul.mubr.f32.gmra.mrb[0].mxu0 %v171
    %v384 = vpop.f32.mrb[0].mxu0
    %v385 = vadd.f32 %v291, %v384
    %v386 = vpop.f32.mrb[0].mxu0
    %387 = vmatprep.mubr.f32.mxu0 0.0
    %388 = vmatmul.mubr.f32.gmra.mrb[0].mxu0 %v174
    %v389 = vpop.f32.mrb[0].mxu0
    %v390 = vadd.f32 %v291, %v389
    %v391 = vpop.f32.mrb[0].mxu0
    %392 = vmatprep.mubr.f32.mxu0 0.0
    %393 = vmatmul.mubr.f32.gmra.mrb[0].mxu0 %v177
    %v394 = vpop.f32.mrb[0].mxu0
    %v395 = vadd.f32 %v291, %v394
    %v396 = vpop.f32.mrb[0].mxu0
    %397 = vdwg.mxu0
    %vm398 = vcmask 523264
    %399 = vst.msk [vmem:[#allocation2] sm:$0xff] %vm398, %v246
    %400 = vst.msk [vmem:[#allocation2 + $0x8] sm:$0xff] %vm398, %v251
    %401 = vst.msk [vmem:[#allocation2 + $0x10] sm:$0xff] %vm398, %v256
    %402 = vst.msk [vmem:[#allocation2 + $0x18] sm:$0xff] %vm398, %v261
    %403 = vst.msk [vmem:[#allocation2 + $0x20] sm:$0xff] %vm398, %v266
    %404 = vst.msk [vmem:[#allocation2 + $0x28] sm:$0xff] %vm398, %v271
    %405 = vst.msk [vmem:[#allocation2 + $0x30] sm:$0xff] %vm398, %v276
    %406 = vst.msk [vmem:[#allocation2 + $0x38] sm:$0xff] %vm398, %v281
    %407 = vst.msk [vmem:[#allocation3] sm:$0xff] %vm398, %v360
    %408 = vst.msk [vmem:[#allocation3 + $0x8] sm:$0xff] %vm398, %v365
    %409 = vst.msk [vmem:[#allocation3 + $0x10] sm:$0xff] %vm398, %v370
    %410 = vst.msk [vmem:[#allocation3 + $0x18] sm:$0xff] %vm398, %v375
    %411 = vst.msk [vmem:[#allocation3 + $0x20] sm:$0xff] %vm398, %v380
    %412 = vst.msk [vmem:[#allocation3 + $0x28] sm:$0xff] %vm398, %v385
    %413 = vst.msk [vmem:[#allocation3 + $0x30] sm:$0xff] %vm398, %v390
    %414 = vst.msk [vmem:[#allocation3 + $0x38] sm:$0xff] %vm398, %v395
    %v415 = vld [vmem:[%s5] sm:$0xff]
    %v416 = vld [vmem:[%s5 + $0x8] sm:$0xff]
    %v417 = vld [vmem:[#allocation12] sm:$0xff]
    %v418 = vld [vmem:[#allocation12 + $0x8] sm:$0xff]
    %v419 = vld [vmem:[#allocation14] sm:$0xff]
    %v420 = vld [vmem:[#allocation15] sm:$0xff]
    loop: start=0, step=1, limit=8
    $region78: #{tpu_custom_call.1} parent=1 // loop_pre_header
      _
    $region79: #{tpu_custom_call.1} parent=1 // loop_header
      %s422 = sphi 0, %s426
      %p423 = scmp.ge.s32.totalorder %s422, 8
      %v427 = vphi %v419, %v536
      %v428 = vphi %v420, %v542
    $region80: #{tpu_custom_call.1} parent=1 // loop_header_branch
      %425 = sbr.rel (%p423) target = $region84
    $region81: #{tpu_custom_call.1} parent=1 // loop_body
      %s429 = smul.u32 %s422, 8
      %s430 = scalar_lea.vmem [#allocation2], %s429
      %v431 = vld [vmem:[%s430] sm:$0xff]
      %v433 = vsel %vm154, %v427, 0
      %435 = vmatprep.subr.mxu0 0.0
      %436 = vmatpush1.msra.mxu0 %v415
      %437 = vmatprep.subr.mxu0 0.0
      %438 = vmatpush1.msra.mxu0 %v416
      %439 = vmatprep.subr.mxu0 0.0
      %440 = vmatpush1.msra.mxu0 0.0
      %441 = vmatprep.subr.mxu0 0.0
      %442 = vmatpush1.msra.mxu0 0.0
      %443 = vmatprep.subr.mxu0 0.0
      %444 = vmatpush1.msra.mxu0 0.0
      %445 = vmatprep.subr.mxu0 0.0
      %446 = vmatpush1.msra.mxu0 0.0
      %447 = vmatprep.subr.mxu0 0.0
      %448 = vmatpush1.msra.mxu0 0.0
      %449 = vmatprep.subr.mxu0 0.0
      %450 = vmatpush1.msra.mxu0 0.0
      %451 = vmatprep.subr.mxu0 0.0
      %452 = vmatpush1.msra.mxu0 0.0
      %453 = vmatprep.subr.mxu0 0.0
      %454 = vmatpush1.msra.mxu0 0.0
      %455 = vmatprep.subr.mxu0 0.0
      %456 = vmatpush1.msra.mxu0 0.0
      %457 = vmatprep.subr.mxu0 0.0
      %458 = vmatpush1.msra.mxu0 0.0
      %459 = vmatprep.subr.mxu0 0.0
      %460 = vmatpush1.msra.mxu0 0.0
      %461 = vmatprep.subr.mxu0 0.0
      %462 = vmatpush1.msra.mxu0 0.0
      %463 = vmatprep.subr.mxu0 0.0
      %464 = vmatpush1.msra.mxu0 0.0
      %465 = vmatprep.subr.mxu0 0.0
      %466 = vmatpush1.msra.mxu0 0.0
      %467 = vmatprep.subr.mxu0 0.0
      %468 = vmatpush1.msra.mxu0 0.0
      %469 = vmatprep.subr.mxu0 0.0
      %470 = vmatpush1.msra.mxu0 0.0
      %471 = vmatprep.subr.mxu0 0.0
      %472 = vmatpush1.msra.mxu0 0.0
      %473 = vmatprep.subr.mxu0 0.0
      %474 = vmatpush1.msra.mxu0 0.0
      %475 = vmatprep.subr.mxu0 0.0
      %476 = vmatpush1.msra.mxu0 0.0
      %477 = vmatprep.subr.mxu0 0.0
      %478 = vmatpush1.msra.mxu0 0.0
      %479 = vmatprep.subr.mxu0 0.0
      %480 = vmatpush1.msra.mxu0 0.0
      %481 = vmatprep.subr.mxu0 0.0
      %482 = vmatpush1.msra.mxu0 0.0
      %483 = vmatprep.subr.mxu0 0.0
      %484 = vmatpush1.msra.mxu0 0.0
      %485 = vmatprep.subr.mxu0 0.0
      %486 = vmatpush1.msra.mxu0 0.0
      %487 = vmatprep.subr.mxu0 0.0
      %488 = vmatpush1.msra.mxu0 0.0
      %489 = vmatprep.subr.mxu0 0.0
      %490 = vmatpush1.msra.mxu0 0.0
      %491 = vmatprep.subr.mxu0 0.0
      %492 = vmatpush1.msra.mxu0 0.0
      %493 = vmatprep.subr.mxu0 0.0
      %494 = vmatpush1.msra.mxu0 0.0
      %495 = vmatprep.subr.mxu0 0.0
      %496 = vmatpush1.msra.mxu0 0.0
      %497 = vmatprep.subr.mxu0 0.0
      %498 = vmatpush1.msra.mxu0 0.0
      %499 = vmatprep.mubr.f32.mxu0 0.0
      %500 = vmatmul.mubr.f32.gmra.mrb[0].mxu0 %v433
      %v501 = vpop.f32.mrb[0].mxu0
      %v502 = vadd.f32 0.0, %v501
      %v503 = vpop.f32.mrb[0].mxu0
      %504 = vdwg.mxu0
      %v505 = vadd.f32 %v431, %v502
      %v506 = vsub.f32 0.0, %v505
      %v507 = vmul.f32 %v506, 1.442695
      %v508 = vpow.pop %v507
      %v509 = vadd.f32 %v508, 1.0
      %v510 = vrcp.pop %v509
      %v511 = vmul.f32 1.0, %v510
      %v512 = vtanh.pop %v505
      %514 = vrot.lane.b32.xlu0 %v428, 16
      %v515 = vpop.permute.xlu0 %514
      %v517 = vmul.f32 %v511, %v515
      %519 = vrot.lane.b32.xlu0 %v512, 80
      %v520 = vpop.permute.xlu0 %519
      %v522 = vmul.f32 %v511, %v520
      %524 = vrot.lane.b32.xlu0 %v522, 16
      %v525 = vpop.permute.xlu0 %524
      %v527 = vadd.f32 %v517, %v525
      %v528 = vtanh.pop %v527
      %530 = vrot.lane.b32.xlu0 %v528, 16
      %v531 = vpop.permute.xlu0 %530
      %v533 = vmul.f32 %v511, %v531
      %535 = vrot.lane.b32.xlu0 %v533, 96
      %v536 = vpop.permute.xlu0 %535
      %s538 = scalar_lea.vmem [#allocation4], %s429
      %539 = vst.msk [vmem:[%s538] sm:$0xff] %vm154, %v536
      %541 = vrot.lane.b32.xlu0 %v527, 112
      %v542 = vpop.permute.xlu0 %541
    $region82: #{tpu_custom_call.1} parent=1 // loop_footer
      %s426 = sadd.s32 1, %s422
    $region83: #{tpu_custom_call.1} parent=1 // loop_footer_branch
      %421 = sbr.rel target = $region79
    $region84: #{tpu_custom_call.1} parent=1 // loop_exit
      _
    %s544 = scalar_lea.vmem [#allocation14], 8
    %v545 = vld [vmem:[%s544] sm:$0xff]
    %s546 = scalar_lea.vmem [#allocation15], 8
    %v547 = vld [vmem:[%s546] sm:$0xff]
    loop: start=0, step=1, limit=8
    $region85: #{tpu_custom_call.1} parent=1 // loop_pre_header
      _
    $region86: #{tpu_custom_call.1} parent=1 // loop_header
      %s549 = sphi 0, %s553
      %p550 = scmp.ge.s32.totalorder %s549, 8
      %v554 = vphi %v545, %v664
      %v555 = vphi %v547, %v670
    $region87: #{tpu_custom_call.1} parent=1 // loop_header_branch
      %552 = sbr.rel (%p550) target = $region91
    $region88: #{tpu_custom_call.1} parent=1 // loop_body
      %s556 = ssub.s32 7, %s549
      %s557 = smul.u32 %s556, 8
      %s558 = scalar_lea.vmem [#allocation3], %s557
      %v559 = vld [vmem:[%s558] sm:$0xff]
      %v561 = vsel %vm154, %v554, 0
      %563 = vmatprep.subr.mxu0 0.0
      %564 = vmatpush1.msra.mxu0 %v417
      %565 = vmatprep.subr.mxu0 0.0
      %566 = vmatpush1.msra.mxu0 %v418
      %567 = vmatprep.subr.mxu0 0.0
      %568 = vmatpush1.msra.mxu0 0.0
      %569 = vmatprep.subr.mxu0 0.0
      %570 = vmatpush1.msra.mxu0 0.0
      %571 = vmatprep.subr.mxu0 0.0
      %572 = vmatpush1.msra.mxu0 0.0
      %573 = vmatprep.subr.mxu0 0.0
      %574 = vmatpush1.msra.mxu0 0.0
      %575 = vmatprep.subr.mxu0 0.0
      %576 = vmatpush1.msra.mxu0 0.0
      %577 = vmatprep.subr.mxu0 0.0
      %578 = vmatpush1.msra.mxu0 0.0
      %579 = vmatprep.subr.mxu0 0.0
      %580 = vmatpush1.msra.mxu0 0.0
      %581 = vmatprep.subr.mxu0 0.0
      %582 = vmatpush1.msra.mxu0 0.0
      %583 = vmatprep.subr.mxu0 0.0
      %584 = vmatpush1.msra.mxu0 0.0
      %585 = vmatprep.subr.mxu0 0.0
      %586 = vmatpush1.msra.mxu0 0.0
      %587 = vmatprep.subr.mxu0 0.0
      %588 = vmatpush1.msra.mxu0 0.0
      %589 = vmatprep.subr.mxu0 0.0
      %590 = vmatpush1.msra.mxu0 0.0
      %591 = vmatprep.subr.mxu0 0.0
      %592 = vmatpush1.msra.mxu0 0.0
      %593 = vmatprep.subr.mxu0 0.0
      %594 = vmatpush1.msra.mxu0 0.0
      %595 = vmatprep.subr.mxu0 0.0
      %596 = vmatpush1.msra.mxu0 0.0
      %597 = vmatprep.subr.mxu0 0.0
      %598 = vmatpush1.msra.mxu0 0.0
      %599 = vmatprep.subr.mxu0 0.0
      %600 = vmatpush1.msra.mxu0 0.0
      %601 = vmatprep.subr.mxu0 0.0
      %602 = vmatpush1.msra.mxu0 0.0
      %603 = vmatprep.subr.mxu0 0.0
      %604 = vmatpush1.msra.mxu0 0.0
      %605 = vmatprep.subr.mxu0 0.0
      %606 = vmatpush1.msra.mxu0 0.0
      %607 = vmatprep.subr.mxu0 0.0
      %608 = vmatpush1.msra.mxu0 0.0
      %609 = vmatprep.subr.mxu0 0.0
      %610 = vmatpush1.msra.mxu0 0.0
      %611 = vmatprep.subr.mxu0 0.0
      %612 = vmatpush1.msra.mxu0 0.0
      %613 = vmatprep.subr.mxu0 0.0
      %614 = vmatpush1.msra.mxu0 0.0
      %615 = vmatprep.subr.mxu0 0.0
      %616 = vmatpush1.msra.mxu0 0.0
      %617 = vmatprep.subr.mxu0 0.0
      %618 = vmatpush1.msra.mxu0 0.0
      %619 = vmatprep.subr.mxu0 0.0
      %620 = vmatpush1.msra.mxu0 0.0
      %621 = vmatprep.subr.mxu0 0.0
      %622 = vmatpush1.msra.mxu0 0.0
      %623 = vmatprep.subr.mxu0 0.0
      %624 = vmatpush1.msra.mxu0 0.0
      %625 = vmatprep.subr.mxu0 0.0
      %626 = vmatpush1.msra.mxu0 0.0
      %627 = vmatprep.mubr.f32.mxu0 0.0
      %628 = vmatmul.mubr.f32.gmra.mrb[0].mxu0 %v561
      %v629 = vpop.f32.mrb[0].mxu0
      %v630 = vadd.f32 0.0, %v629
      %v631 = vpop.f32.mrb[0].mxu0
      %632 = vdwg.mxu0
      %v633 = vadd.f32 %v559, %v630
      %v634 = vsub.f32 0.0, %v633
      %v635 = vmul.f32 %v634, 1.442695
      %v636 = vpow.pop %v635
      %v637 = vadd.f32 %v636, 1.0
      %v638 = vrcp.pop %v637
      %v639 = vmul.f32 1.0, %v638
      %v640 = vtanh.pop %v633
      %642 = vrot.lane.b32.xlu0 %v555, 16
      %v643 = vpop.permute.xlu0 %642
      %v645 = vmul.f32 %v639, %v643
      %647 = vrot.lane.b32.xlu0 %v640, 80
      %v648 = vpop.permute.xlu0 %647
      %v650 = vmul.f32 %v639, %v648
      %652 = vrot.lane.b32.xlu0 %v650, 16
      %v653 = vpop.permute.xlu0 %652
      %v655 = vadd.f32 %v645, %v653
      %v656 = vtanh.pop %v655
      %658 = vrot.lane.b32.xlu0 %v656, 16
      %v659 = vpop.permute.xlu0 %658
      %v661 = vmul.f32 %v639, %v659
      %663 = vrot.lane.b32.xlu0 %v661, 96
      %v664 = vpop.permute.xlu0 %663
      %s666 = scalar_lea.vmem [#allocation5], %s557
      %667 = vst.msk [vmem:[%s666] sm:$0xff] %vm154, %v664
      %669 = vrot.lane.b32.xlu0 %v655, 112
      %v670 = vpop.permute.xlu0 %669
    $region89: #{tpu_custom_call.1} parent=1 // loop_footer
      %s553 = sadd.s32 1, %s549
    $region90: #{tpu_custom_call.1} parent=1 // loop_footer_branch
      %548 = sbr.rel target = $region86
    $region91: #{tpu_custom_call.1} parent=1 // loop_exit
      _
    %v672 = vld [vmem:[#allocation4] sm:$0xff]
    %v673 = vld [vmem:[#allocation4 + $0x8] sm:$0xff]
    %v674 = vld [vmem:[#allocation4 + $0x10] sm:$0xff]
    %v675 = vld [vmem:[#allocation4 + $0x18] sm:$0xff]
    %v676 = vld [vmem:[#allocation4 + $0x20] sm:$0xff]
    %v677 = vld [vmem:[#allocation4 + $0x28] sm:$0xff]
    %v678 = vld [vmem:[#allocation4 + $0x30] sm:$0xff]
    %v679 = vld [vmem:[#allocation4 + $0x38] sm:$0xff]
    %v680 = vld [vmem:[#allocation5] sm:$0xff]
    %v681 = vld [vmem:[#allocation5 + $0x8] sm:$0xff]
    %v682 = vld [vmem:[#allocation5 + $0x10] sm:$0xff]
    %v683 = vld [vmem:[#allocation5 + $0x18] sm:$0xff]
    %v684 = vld [vmem:[#allocation5 + $0x20] sm:$0xff]
    %v685 = vld [vmem:[#allocation5 + $0x28] sm:$0xff]
    %v686 = vld [vmem:[#allocation5 + $0x30] sm:$0xff]
    %v687 = vld [vmem:[#allocation5 + $0x38] sm:$0xff]
    %v688 = vld [vmem:[%s9] sm:$0xff]
    %v689 = vld [vmem:[%s9 + $0x8] sm:$0xff]
    %v690 = vld [vmem:[#allocation17] sm:$0xff]
    %v691 = vld [vmem:[#allocation17 + $0x8] sm:$0xff]
    %v693 = vsel %vm154, %v680, 0
    %v696 = vsel %vm154, %v681, 0
    %v699 = vsel %vm154, %v682, 0
    %v702 = vsel %vm154, %v683, 0
    %v705 = vsel %vm154, %v684, 0
    %v708 = vsel %vm154, %v685, 0
    %v711 = vsel %vm154, %v686, 0
    %v714 = vsel %vm154, %v687, 0
    %716 = vmatprep.subr.mxu0 0.0
    %717 = vmatpush1.msra.mxu0 %v690
    %718 = vmatprep.subr.mxu0 0.0
    %719 = vmatpush1.msra.mxu0 %v691
    %720 = vmatprep.subr.mxu0 0.0
    %721 = vmatpush1.msra.mxu0 0.0
    %722 = vmatprep.subr.mxu0 0.0
    %723 = vmatpush1.msra.mxu0 0.0
    %724 = vmatprep.subr.mxu0 0.0
    %725 = vmatpush1.msra.mxu0 0.0
    %726 = vmatprep.subr.mxu0 0.0
    %727 = vmatpush1.msra.mxu0 0.0
    %728 = vmatprep.subr.mxu0 0.0
    %729 = vmatpush1.msra.mxu0 0.0
    %730 = vmatprep.subr.mxu0 0.0
    %731 = vmatpush1.msra.mxu0 0.0
    %732 = vmatprep.subr.mxu0 0.0
    %733 = vmatpush1.msra.mxu0 0.0
    %734 = vmatprep.subr.mxu0 0.0
    %735 = vmatpush1.msra.mxu0 0.0
    %736 = vmatprep.subr.mxu0 0.0
    %737 = vmatpush1.msra.mxu0 0.0
    %738 = vmatprep.subr.mxu0 0.0
    %739 = vmatpush1.msra.mxu0 0.0
    %740 = vmatprep.subr.mxu0 0.0
    %741 = vmatpush1.msra.mxu0 0.0
    %742 = vmatprep.subr.mxu0 0.0
    %743 = vmatpush1.msra.mxu0 0.0
    %744 = vmatprep.subr.mxu0 0.0
    %745 = vmatpush1.msra.mxu0 0.0
    %746 = vmatprep.subr.mxu0 0.0
    %747 = vmatpush1.msra.mxu0 0.0
    %748 = vmatprep.subr.mxu0 0.0
    %749 = vmatpush1.msra.mxu0 0.0
    %750 = vmatprep.subr.mxu0 0.0
    %751 = vmatpush1.msra.mxu0 0.0
    %752 = vmatprep.subr.mxu0 0.0
    %753 = vmatpush1.msra.mxu0 0.0
    %754 = vmatprep.subr.mxu0 0.0
    %755 = vmatpush1.msra.mxu0 0.0
    %756 = vmatprep.subr.mxu0 0.0
    %757 = vmatpush1.msra.mxu0 0.0
    %758 = vmatprep.subr.mxu0 0.0
    %759 = vmatpush1.msra.mxu0 0.0
    %760 = vmatprep.subr.mxu0 0.0
    %761 = vmatpush1.msra.mxu0 0.0
    %762 = vmatprep.subr.mxu0 0.0
    %763 = vmatpush1.msra.mxu0 0.0
    %764 = vmatprep.subr.mxu0 0.0
    %765 = vmatpush1.msra.mxu0 0.0
    %766 = vmatprep.subr.mxu0 0.0
    %767 = vmatpush1.msra.mxu0 0.0
    %768 = vmatprep.subr.mxu0 0.0
    %769 = vmatpush1.msra.mxu0 0.0
    %770 = vmatprep.subr.mxu0 0.0
    %771 = vmatpush1.msra.mxu0 0.0
    %772 = vmatprep.subr.mxu0 0.0
    %773 = vmatpush1.msra.mxu0 0.0
    %774 = vmatprep.subr.mxu0 0.0
    %775 = vmatpush1.msra.mxu0 0.0
    %776 = vmatprep.subr.mxu0 0.0
    %777 = vmatpush1.msra.mxu0 0.0
    %778 = vmatprep.subr.mxu0 0.0
    %779 = vmatpush1.msra.mxu0 0.0
    %780 = vmatprep.mubr.f32.mxu0 0.0
    %781 = vmatmul.mubr.f32.gmra.mrb[0].mxu0 %v693
    %v782 = vpop.f32.mrb[0].mxu0
    %v783 = vadd.f32 0.0, %v782
    %v784 = vpop.f32.mrb[0].mxu0
    %785 = vmatprep.mubr.f32.mxu0 0.0
    %786 = vmatmul.mubr.f32.gmra.mrb[0].mxu0 %v696
    %v787 = vpop.f32.mrb[0].mxu0
    %v788 = vadd.f32 0.0, %v787
    %v789 = vpop.f32.mrb[0].mxu0
    %790 = vmatprep.mubr.f32.mxu0 0.0
    %791 = vmatmul.mubr.f32.gmra.mrb[0].mxu0 %v699
    %v792 = vpop.f32.mrb[0].mxu0
    %v793 = vadd.f32 0.0, %v792
    %v794 = vpop.f32.mrb[0].mxu0
    %795 = vmatprep.mubr.f32.mxu0 0.0
    %796 = vmatmul.mubr.f32.gmra.mrb[0].mxu0 %v702
    %v797 = vpop.f32.mrb[0].mxu0
    %v798 = vadd.f32 0.0, %v797
    %v799 = vpop.f32.mrb[0].mxu0
    %800 = vmatprep.mubr.f32.mxu0 0.0
    %801 = vmatmul.mubr.f32.gmra.mrb[0].mxu0 %v705
    %v802 = vpop.f32.mrb[0].mxu0
    %v803 = vadd.f32 0.0, %v802
    %v804 = vpop.f32.mrb[0].mxu0
    %805 = vmatprep.mubr.f32.mxu0 0.0
    %806 = vmatmul.mubr.f32.gmra.mrb[0].mxu0 %v708
    %v807 = vpop.f32.mrb[0].mxu0
    %v808 = vadd.f32 0.0, %v807
    %v809 = vpop.f32.mrb[0].mxu0
    %810 = vmatprep.mubr.f32.mxu0 0.0
    %811 = vmatmul.mubr.f32.gmra.mrb[0].mxu0 %v711
    %v812 = vpop.f32.mrb[0].mxu0
    %v813 = vadd.f32 0.0, %v812
    %v814 = vpop.f32.mrb[0].mxu0
    %815 = vmatprep.mubr.f32.mxu0 0.0
    %816 = vmatmul.mubr.f32.gmra.mrb[0].mxu0 %v714
    %v817 = vpop.f32.mrb[0].mxu0
    %v818 = vadd.f32 0.0, %v817
    %v819 = vpop.f32.mrb[0].mxu0
    %820 = vdwg.mxu0
    %v822 = vsel %vm154, %v672, 0
    %v825 = vsel %vm154, %v673, 0
    %v828 = vsel %vm154, %v674, 0
    %v831 = vsel %vm154, %v675, 0
    %v834 = vsel %vm154, %v676, 0
    %v837 = vsel %vm154, %v677, 0
    %v840 = vsel %vm154, %v678, 0
    %v843 = vsel %vm154, %v679, 0
    %845 = vmatprep.subr.mxu0 0.0
    %846 = vmatpush1.msra.mxu0 %v688
    %847 = vmatprep.subr.mxu0 0.0
    %848 = vmatpush1.msra.mxu0 %v689
    %849 = vmatprep.subr.mxu0 0.0
    %850 = vmatpush1.msra.mxu0 0.0
    %851 = vmatprep.subr.mxu0 0.0
    %852 = vmatpush1.msra.mxu0 0.0
    %853 = vmatprep.subr.mxu0 0.0
    %854 = vmatpush1.msra.mxu0 0.0
    %855 = vmatprep.subr.mxu0 0.0
    %856 = vmatpush1.msra.mxu0 0.0
    %857 = vmatprep.subr.mxu0 0.0
    %858 = vmatpush1.msra.mxu0 0.0
    %859 = vmatprep.subr.mxu0 0.0
    %860 = vmatpush1.msra.mxu0 0.0
    %861 = vmatprep.subr.mxu0 0.0
    %862 = vmatpush1.msra.mxu0 0.0
    %863 = vmatprep.subr.mxu0 0.0
    %864 = vmatpush1.msra.mxu0 0.0
    %865 = vmatprep.subr.mxu0 0.0
    %866 = vmatpush1.msra.mxu0 0.0
    %867 = vmatprep.subr.mxu0 0.0
    %868 = vmatpush1.msra.mxu0 0.0
    %869 = vmatprep.subr.mxu0 0.0
    %870 = vmatpush1.msra.mxu0 0.0
    %871 = vmatprep.subr.mxu0 0.0
    %872 = vmatpush1.msra.mxu0 0.0
    %873 = vmatprep.subr.mxu0 0.0
    %874 = vmatpush1.msra.mxu0 0.0
    %875 = vmatprep.subr.mxu0 0.0
    %876 = vmatpush1.msra.mxu0 0.0
    %877 = vmatprep.subr.mxu0 0.0
    %878 = vmatpush1.msra.mxu0 0.0
    %879 = vmatprep.subr.mxu0 0.0
    %880 = vmatpush1.msra.mxu0 0.0
    %881 = vmatprep.subr.mxu0 0.0
    %882 = vmatpush1.msra.mxu0 0.0
    %883 = vmatprep.subr.mxu0 0.0
    %884 = vmatpush1.msra.mxu0 0.0
    %885 = vmatprep.subr.mxu0 0.0
    %886 = vmatpush1.msra.mxu0 0.0
    %887 = vmatprep.subr.mxu0 0.0
    %888 = vmatpush1.msra.mxu0 0.0
    %889 = vmatprep.subr.mxu0 0.0
    %890 = vmatpush1.msra.mxu0 0.0
    %891 = vmatprep.subr.mxu0 0.0
    %892 = vmatpush1.msra.mxu0 0.0
    %893 = vmatprep.subr.mxu0 0.0
    %894 = vmatpush1.msra.mxu0 0.0
    %895 = vmatprep.subr.mxu0 0.0
    %896 = vmatpush1.msra.mxu0 0.0
    %897 = vmatprep.subr.mxu0 0.0
    %898 = vmatpush1.msra.mxu0 0.0
    %899 = vmatprep.subr.mxu0 0.0
    %900 = vmatpush1.msra.mxu0 0.0
    %901 = vmatprep.subr.mxu0 0.0
    %902 = vmatpush1.msra.mxu0 0.0
    %903 = vmatprep.subr.mxu0 0.0
    %904 = vmatpush1.msra.mxu0 0.0
    %905 = vmatprep.subr.mxu0 0.0
    %906 = vmatpush1.msra.mxu0 0.0
    %907 = vmatprep.subr.mxu0 0.0
    %908 = vmatpush1.msra.mxu0 0.0
    %909 = vmatprep.mubr.f32.mxu0 0.0
    %910 = vmatmul.mubr.f32.gmra.mrb[0].mxu0 %v822
    %v911 = vpop.f32.mrb[0].mxu0
    %v912 = vadd.f32 %v783, %v911
    %v913 = vpop.f32.mrb[0].mxu0
    %914 = vmatprep.mubr.f32.mxu0 0.0
    %915 = vmatmul.mubr.f32.gmra.mrb[0].mxu0 %v825
    %v916 = vpop.f32.mrb[0].mxu0
    %v917 = vadd.f32 %v788, %v916
    %v918 = vpop.f32.mrb[0].mxu0
    %919 = vmatprep.mubr.f32.mxu0 0.0
    %920 = vmatmul.mubr.f32.gmra.mrb[0].mxu0 %v828
    %v921 = vpop.f32.mrb[0].mxu0
    %v922 = vadd.f32 %v793, %v921
    %v923 = vpop.f32.mrb[0].mxu0
    %924 = vmatprep.mubr.f32.mxu0 0.0
    %925 = vmatmul.mubr.f32.gmra.mrb[0].mxu0 %v831
    %v926 = vpop.f32.mrb[0].mxu0
    %v927 = vadd.f32 %v798, %v926
    %v928 = vpop.f32.mrb[0].mxu0
    %929 = vmatprep.mubr.f32.mxu0 0.0
    %930 = vmatmul.mubr.f32.gmra.mrb[0].mxu0 %v834
    %v931 = vpop.f32.mrb[0].mxu0
    %v932 = vadd.f32 %v803, %v931
    %v933 = vpop.f32.mrb[0].mxu0
    %934 = vmatprep.mubr.f32.mxu0 0.0
    %935 = vmatmul.mubr.f32.gmra.mrb[0].mxu0 %v837
    %v936 = vpop.f32.mrb[0].mxu0
    %v937 = vadd.f32 %v808, %v936
    %v938 = vpop.f32.mrb[0].mxu0
    %939 = vmatprep.mubr.f32.mxu0 0.0
    %940 = vmatmul.mubr.f32.gmra.mrb[0].mxu0 %v840
    %v941 = vpop.f32.mrb[0].mxu0
    %v942 = vadd.f32 %v813, %v941
    %v943 = vpop.f32.mrb[0].mxu0
    %944 = vmatprep.mubr.f32.mxu0 0.0
    %945 = vmatmul.mubr.f32.gmra.mrb[0].mxu0 %v843
    %v946 = vpop.f32.mrb[0].mxu0
    %v947 = vadd.f32 %v818, %v946
    %v948 = vpop.f32.mrb[0].mxu0
    %949 = vdwg.mxu0
    %v950 = vld [vmem:[%s11] sm:$0x1]
    %v952 = vlaneseq
    %v953 = vshrl.u32 %v952, 7
    %v954 = vsub.s32 0, %v953
    %v955 = vrot.slane %v950, %v954
    %v957 = vadd.f32 %v912, %v955
    %v958 = vadd.f32 %v917, %v955
    %v959 = vadd.f32 %v922, %v955
    %v960 = vadd.f32 %v927, %v955
    %v961 = vadd.f32 %v932, %v955
    %v962 = vadd.f32 %v937, %v955
    %v963 = vadd.f32 %v942, %v955
    %v964 = vadd.f32 %v947, %v955
    %965 = vst [vmem:[#allocation18] sm:$0xff] %v957
    %966 = vst [vmem:[#allocation18 + $0x8] sm:$0xff] %v958
    %967 = vst [vmem:[#allocation18 + $0x10] sm:$0xff] %v959
    %968 = vst [vmem:[#allocation18 + $0x18] sm:$0xff] %v960
    %969 = vst [vmem:[#allocation18 + $0x20] sm:$0xff] %v961
    %970 = vst [vmem:[#allocation18 + $0x28] sm:$0xff] %v962
    %971 = vst [vmem:[#allocation18 + $0x30] sm:$0xff] %v963
    %972 = vst [vmem:[#allocation18 + $0x38] sm:$0xff] %v964
    // Predicated region
    $region92: #{tpu_custom_call.1} parent=1 // pred_check
      _
    $region93: #{tpu_custom_call.1} parent=1 // pred_check_branch
      %974 = sbr.rel (0) target = $region95
    $region94: #{tpu_custom_call.1} parent=1 // pred_region
      %s976 = ssub.s32 1024, 1024
      %977 = vsyncadd [#allocation8], %s976
      %s978 = sshll.u32 [#allocation18], 4
      %s979 = int_to_ptr.vmem [resolvable:$true] %s978
      %984 = dma.vmem_to_hbm [thread:$0]  %s979, 1024, %s12, [#allocation8], 128, 128, 8
    $region95: #{tpu_custom_call.1} parent=1 // pred_fallthru
      _
    // Predicated region
    $region96: #{tpu_custom_call.1} parent=1 // pred_check
      _
    $region97: #{tpu_custom_call.1} parent=1 // pred_check_branch
      %986 = sbr.rel (0) target = $region99
    $region98: #{tpu_custom_call.1} parent=1 // pred_region
      %987 = dma.done [#allocation8], 1024
    $region99: #{tpu_custom_call.1} parent=1 // pred_fallthru
      _
    %988 = vsyncpa [#allocation7], 1
    %989 = vsyncpa [#allocation10], 1
    %990 = vsyncpa [#allocation13], 1
    %991 = vsyncpa [#allocation16], 1
    %992 = vsyncpa [#allocation8], 1

</llo_original>
